<compile_context>
chip_gen: v5e
topology: v5e:2x2
jax: 0.10.0
libtpu: 0.0.40
codegen_flags: <defaults>
</compile_context>

<pallas_src>
import math
import numpy as np
import jax
import jax.numpy as jnp
from jax import lax
from jax.experimental import pallas as pl
from jax.experimental.pallas import tpu as pltpu

# ----------------------- problem sizes (small, deterministic) -----------------
B, C_IN, C_OUT, RES, KS = 2, 4, 8, 16, 3
PAD = KS // 2
HW = RES * RES                               # 256 spatial positions -> lane dim
K_DIM = KS * KS * C_IN                       # 36 = contraction dim of the fused conv matmul
WEIGHT_GAIN = 1.0 / math.sqrt(C_IN * KS * KS)
LRELU_SLOPE = 0.2
ACT_GAIN = math.sqrt(2.0)                    # lrelu def_gain
GAIN = 1.0                                   # forward(gain=1)

# TODO(synk): up/down != 1 (upfirdn2d resample_filter path) and mode='3d' are
# not implemented; this kernel covers the up=down=1 '2d' configuration.


# ------------------------------- Pallas kernel --------------------------------
def conv2d_layer_kernel(x_ref, w_ref, b_ref, o_ref, slab_ref):
    nb = x_ref.shape[0]                      # batch elements handled this step (static)
    lanes = nb * HW

    # Fold this step's batch slice onto the lane axis: (C_IN, nb*HW).
    # Each 256-lane image is an integer number of vregs wide, so this lane
    # concat is just vreg placement -- no intra-vreg shuffles.
    if nb == 1:
        xin = x_ref[0]
    else:
        xin = jnp.concatenate([x_ref[b] for b in range(nb)], axis=1)

    # Per-lane (row, col) inside its own 16x16 image; RES is a power of two so
    # these are shift/and, never real integer division.
    pos = lax.broadcasted_iota(jnp.int32, (1, lanes), 1)
    yy = (pos >> 4) & (RES - 1)
    xx = pos & (RES - 1)
    # Elementary edge masks, computed once and AND-combined per tap.  They
    # also zero every lane where a roll leaks across the batch boundary.
    m_top = yy >= 1                           # needed when dy == -1
    m_bot = yy <= RES - 2                     # needed when dy == +1
    m_lft = xx >= 1                           # needed when dx == -1
    m_rgt = xx <= RES - 2                     # needed when dx == +1

    # im2col: each 3x3 tap is a lane roll of the flattened image(s) plus an
    # edge mask (implicit zero padding of 1).  Tap t occupies slab rows
    # [t*C_IN, (t+1)*C_IN) -- no padded channel rows, so no zero-init needed.
    for ky in range(KS):
        for kx in range(KS):
            dy, dx = ky - PAD, kx - PAD
            delta = dy * RES + dx
            src = pltpu.roll(xin, shift=(-delta) % lanes, axis=1) if delta else xin
            valid = None
            if dy < 0:
                valid = m_top
            if dy > 0:
                valid = m_bot
            if dx < 0:
                valid = m_lft if valid is None else (valid & m_lft)
            if dx > 0:
                valid = m_rgt if valid is None else (valid & m_rgt)
            tap = src if valid is None else jnp.where(valid, src, 0.0)
            t = ky * KS + kx
            slab_ref[pl.ds(t * C_IN, C_IN), :] = tap

    # Single fused conv matmul: (C_OUT, 36) @ (36, lanes) -> (C_OUT, lanes).
    y = jnp.dot(w_ref[...], slab_ref[...], preferred_element_type=jnp.float32)

    # bias_act: the activation gain is already folded into w and b, so the
    # epilogue is just bias + leaky_relu (conv_clamp=None).
    y = y + b_ref[...]                        # (C_OUT, 1) broadcast over lanes
    y = jnp.where(y >= 0.0, y, LRELU_SLOPE * y)

    # Emit each batch element's (C_OUT, HW) slice (128-aligned lane slices).
    for b in range(nb):
        o_ref[b] = y[:, b * HW:(b + 1) * HW].astype(o_ref.dtype)


# ------------------------------- wrapper ---------------------------------------
def _prep_weight(weight):
    """(C_OUT, C_IN, kh, kw) -> (C_OUT, kh*kw*C_IN) with weight_gain*act_gain folded in."""
    w = (weight * (WEIGHT_GAIN * ACT_GAIN * GAIN)).astype(jnp.float32)
    w = jnp.transpose(w, (0, 2, 3, 1))                      # (C_OUT, ky, kx, C_IN)
    return w.reshape(C_OUT, K_DIM)                          # column (ky*3+kx)*C_IN + c


def _batch_per_step():
    """Batch elements per grid step.

    Dual-TensorCore chips (v7x): 1 per step so ('parallel',) maps the batch
    onto both cores.  Single-TC v5e/v6e: fold the whole batch into one
    512-lane step to avoid paying per-step fixed overhead twice on a
    sub-microsecond body.
    """
    try:
        kind = jax.devices()[0].device_kind.lower()
        if ("v7" in kind) or ("tpu7" in kind):
            return 1
    except Exception:
        pass
    return B


def conv2d_layer_pallas(x_nchw, weight, bias, gain=1.0):
    """x_nchw: (B, C_in, H, W) f32; weight: (C_out, C_in, 3, 3); bias: (C_out,)."""
    Bn, Cin, H, W = x_nchw.shape
    assert (Cin, H, W) == (C_IN, RES, RES) and gain == GAIN and Bn == B

    nb = _batch_per_step()
    if Bn % nb:
        nb = 1
    lanes = nb * HW

    # Glue: metadata-only reshape of x (stays NCHW-contiguous) + tiny param prep.
    x_flat = x_nchw.reshape(Bn, Cin, H * W).astype(jnp.float32)
    w2d = _prep_weight(weight)
    bias_col = (bias.astype(jnp.float32) * (ACT_GAIN * GAIN)).reshape(C_OUT, 1)

    out = pl.pallas_call(
        conv2d_layer_kernel,
        out_shape=jax.ShapeDtypeStruct((Bn, C_OUT, H * W), jnp.float32),
        grid_spec=pltpu.PrefetchScalarGridSpec(
            num_scalar_prefetch=0,
            grid=(Bn // nb,),
            in_specs=[
                pl.BlockSpec((nb, C_IN, H * W), lambda b: (b, 0, 0)),   # x, (nb, 4, 256)
                pl.BlockSpec((C_OUT, K_DIM), lambda b: (0, 0)),          # weight (8, 36)
                pl.BlockSpec((C_OUT, 1), lambda b: (0, 0)),              # bias column
            ],
            out_specs=pl.BlockSpec((nb, C_OUT, H * W), lambda b: (b, 0, 0)),
            scratch_shapes=[pltpu.VMEM((K_DIM, lanes), jnp.float32)],    # im2col slab
        ),
        compiler_params=pltpu.CompilerParams(
            dimension_semantics=("parallel",)),
    )(x_flat, w2d, bias_col)

    return out.reshape(Bn, C_OUT, H, W)                     # free reshape to NCHW


# ----------------------------- pure-JAX reference ------------------------------
def conv2d_layer_ref(x_nchw, weight, bias, gain=1.0):
    w = weight * WEIGHT_GAIN
    y = lax.conv_general_dilated(
        x_nchw, w, window_strides=(1, 1),
        padding=[(PAD, PAD), (PAD, PAD)],
        dimension_numbers=('NCHW', 'OIHW', 'NCHW'))
    y = y + bias[None, :, None, None]
    y = jnp.where(y >= 0.0, y, LRELU_SLOPE * y) * (ACT_GAIN * gain)
    return y


# ------------------------------------ main -------------------------------------
if __name__ == "__main__":
    key = jax.random.PRNGKey(0)
    k_x, k_w, k_b = jax.random.split(key, 3)

    # deterministic "parameters" (shapes follow Conv2dLayer.__init__)
    x = jax.random.normal(k_x, (B, C_IN, RES, RES), jnp.float32)            # NCHW input
    weight = jax.random.normal(k_w, (C_OUT, C_IN, KS, KS), jnp.float32)     # conv weight
    bias = 0.1 * jax.random.normal(k_b, (C_OUT,), jnp.float32)              # torch inits 0; nonzero to exercise path

    out = conv2d_layer_pallas(x, weight, bias)
    out = jax.block_until_ready(out)

    ref = conv2d_layer_ref(x, weight, bias)
    np.testing.assert_allclose(np.asarray(out), np.asarray(ref),
                               rtol=1e-4, atol=1e-4)
    print("KERNEL_OK")
</pallas_src>

<mosaic_0001>
module attributes {stable_mosaic.version = 11 : i64} {
  func.func @conv2d_layer_kernel(%arg0: i32, %arg1: memref<2x4x256xf32, #tpu.memory_space<vmem>>, %arg2: memref<8x36xf32, #tpu.memory_space<vmem>>, %arg3: memref<8x1xf32, #tpu.memory_space<vmem>>, %arg4: memref<2x8x256xf32, #tpu.memory_space<vmem>>, %arg5: memref<36x512xf32, #tpu.memory_space<vmem>>) attributes {dimension_semantics = [#tpu.dimension_semantics<parallel>], iteration_bounds = array<i64: 1>, scalar_prefetch = 0 : i64, scratch_operands = 1 : i64, tpu.core_type = #tpu.core_type<tc>, window_params = [{transform_indices = @transform_0, window_bounds = array<i64: 2, 4, 256>}, {pipeline_mode = #tpu.pipeline_mode<synchronous>, transform_indices = @transform_1, window_bounds = array<i64: 8, 36>}, {pipeline_mode = #tpu.pipeline_mode<synchronous>, transform_indices = @transform_2, window_bounds = array<i64: 8, 1>}, {transform_indices = @transform_3, window_bounds = array<i64: 2, 8, 256>}]} {
    %c0 = arith.constant 0 : index
    %c0_0 = arith.constant 0 : index
    %c0_1 = arith.constant 0 : index
    %0 = vector.load %arg1[%c0, %c0_0, %c0_1] : memref<2x4x256xf32, #tpu.memory_space<vmem>>, vector<1x4x256xf32>
    %1 = vector.shape_cast %0 : vector<1x4x256xf32> to vector<4x256xf32>
    %c1 = arith.constant 1 : index
    %c0_2 = arith.constant 0 : index
    %c0_3 = arith.constant 0 : index
    %2 = vector.load %arg1[%c1, %c0_2, %c0_3] : memref<2x4x256xf32, #tpu.memory_space<vmem>>, vector<1x4x256xf32>
    %3 = vector.shape_cast %2 : vector<1x4x256xf32> to vector<4x256xf32>
    %4 = tpu.concatenate %1, %3 in 1 : vector<4x256xf32>, vector<4x256xf32> -> vector<4x512xf32>
    %5 = tpu.iota {dimensions = array<i32: 1>} : vector<1x512xi32>
    %c4_i32 = arith.constant 4 : i32
    %6 = vector.broadcast %c4_i32 : i32 to vector<1x512xi32>
    %7 = arith.shrsi %5, %6 : vector<1x512xi32>
    %c15_i32 = arith.constant 15 : i32
    %8 = vector.broadcast %c15_i32 : i32 to vector<1x512xi32>
    %9 = arith.andi %7, %8 : vector<1x512xi32>
    %c15_i32_4 = arith.constant 15 : i32
    %10 = vector.broadcast %c15_i32_4 : i32 to vector<1x512xi32>
    %11 = arith.andi %5, %10 : vector<1x512xi32>
    %c1_i32 = arith.constant 1 : i32
    %12 = vector.broadcast %c1_i32 : i32 to vector<1x512xi32>
    %13 = arith.cmpi sge, %9, %12 : vector<1x512xi32>
    %c14_i32 = arith.constant 14 : i32
    %14 = vector.broadcast %c14_i32 : i32 to vector<1x512xi32>
    %15 = arith.cmpi sle, %9, %14 : vector<1x512xi32>
    %c1_i32_5 = arith.constant 1 : i32
    %16 = vector.broadcast %c1_i32_5 : i32 to vector<1x512xi32>
    %17 = arith.cmpi sge, %11, %16 : vector<1x512xi32>
    %c14_i32_6 = arith.constant 14 : i32
    %18 = vector.broadcast %c14_i32_6 : i32 to vector<1x512xi32>
    %19 = arith.cmpi sle, %11, %18 : vector<1x512xi32>
    %c17_i32 = arith.constant 17 : i32
    %20 = tpu.dynamic_rotate %4 by %c17_i32 dim 1 : vector<4x512xf32>, i32 -> vector<4x512xf32>
    %21 = arith.andi %13, %17 : vector<1x512xi1>
    %cst = arith.constant 0.000000e+00 : f32
    %22 = vector.shape_cast %21 : vector<1x512xi1> to vector<1x512xi1>
    %23 = vector.broadcast %22 : vector<1x512xi1> to vector<4x512xi1>
    %24 = vector.broadcast %cst : f32 to vector<4x512xf32>
    %25 = arith.select %23, %20, %24 : vector<4x512xi1>, vector<4x512xf32>
    %c0_7 = arith.constant 0 : index
    %c0_8 = arith.constant 0 : index
    %26 = vector.load %arg5[%c0_7, %c0_8] : memref<36x512xf32, #tpu.memory_space<vmem>>, vector<4x512xf32>
    tpu.vector_store %arg5[%c0_7, %c0_8], %25 {strides = array<i32>} : memref<36x512xf32, #tpu.memory_space<vmem>>, vector<4x512xf32>,
    %c16_i32 = arith.constant 16 : i32
    %27 = tpu.dynamic_rotate %4 by %c16_i32 dim 1 : vector<4x512xf32>, i32 -> vector<4x512xf32>
    %cst_9 = arith.constant 0.000000e+00 : f32
    %28 = vector.shape_cast %13 : vector<1x512xi1> to vector<1x512xi1>
    %29 = vector.broadcast %28 : vector<1x512xi1> to vector<4x512xi1>
    %30 = vector.broadcast %cst_9 : f32 to vector<4x512xf32>
    %31 = arith.select %29, %27, %30 : vector<4x512xi1>, vector<4x512xf32>
    %c4 = arith.constant 4 : index
    %c0_10 = arith.constant 0 : index
    %32 = vector.load %arg5[%c4, %c0_10] : memref<36x512xf32, #tpu.memory_space<vmem>>, vector<4x512xf32>
    tpu.vector_store %arg5[%c4, %c0_10], %31 {strides = array<i32>} : memref<36x512xf32, #tpu.memory_space<vmem>>, vector<4x512xf32>,
    %c15_i32_11 = arith.constant 15 : i32
    %33 = tpu.dynamic_rotate %4 by %c15_i32_11 dim 1 : vector<4x512xf32>, i32 -> vector<4x512xf32>
    %34 = arith.andi %13, %19 : vector<1x512xi1>
    %cst_12 = arith.constant 0.000000e+00 : f32
    %35 = vector.shape_cast %34 : vector<1x512xi1> to vector<1x512xi1>
    %36 = vector.broadcast %35 : vector<1x512xi1> to vector<4x512xi1>
    %37 = vector.broadcast %cst_12 : f32 to vector<4x512xf32>
    %38 = arith.select %36, %33, %37 : vector<4x512xi1>, vector<4x512xf32>
    %c8 = arith.constant 8 : index
    %c0_13 = arith.constant 0 : index
    %39 = vector.load %arg5[%c8, %c0_13] : memref<36x512xf32, #tpu.memory_space<vmem>>, vector<4x512xf32>
    tpu.vector_store %arg5[%c8, %c0_13], %38 {strides = array<i32>} : memref<36x512xf32, #tpu.memory_space<vmem>>, vector<4x512xf32>,
    %c1_i32_14 = arith.constant 1 : i32
    %40 = tpu.dynamic_rotate %4 by %c1_i32_14 dim 1 : vector<4x512xf32>, i32 -> vector<4x512xf32>
    %cst_15 = arith.constant 0.000000e+00 : f32
    %41 = vector.shape_cast %17 : vector<1x512xi1> to vector<1x512xi1>
    %42 = vector.broadcast %41 : vector<1x512xi1> to vector<4x512xi1>
    %43 = vector.broadcast %cst_15 : f32 to vector<4x512xf32>
    %44 = arith.select %42, %40, %43 : vector<4x512xi1>, vector<4x512xf32>
    %c12 = arith.constant 12 : index
    %c0_16 = arith.constant 0 : index
    %45 = vector.load %arg5[%c12, %c0_16] : memref<36x512xf32, #tpu.memory_space<vmem>>, vector<4x512xf32>
    tpu.vector_store %arg5[%c12, %c0_16], %44 {strides = array<i32>} : memref<36x512xf32, #tpu.memory_space<vmem>>, vector<4x512xf32>,
    %c16 = arith.constant 16 : index
    %c0_17 = arith.constant 0 : index
    %46 = vector.load %arg5[%c16, %c0_17] : memref<36x512xf32, #tpu.memory_space<vmem>>, vector<4x512xf32>
    tpu.vector_store %arg5[%c16, %c0_17], %4 {strides = array<i32>} : memref<36x512xf32, #tpu.memory_space<vmem>>, vector<4x512xf32>,
    %c511_i32 = arith.constant 511 : i32
    %47 = tpu.dynamic_rotate %4 by %c511_i32 dim 1 : vector<4x512xf32>, i32 -> vector<4x512xf32>
    %cst_18 = arith.constant 0.000000e+00 : f32
    %48 = vector.shape_cast %19 : vector<1x512xi1> to vector<1x512xi1>
    %49 = vector.broadcast %48 : vector<1x512xi1> to vector<4x512xi1>
    %50 = vector.broadcast %cst_18 : f32 to vector<4x512xf32>
    %51 = arith.select %49, %47, %50 : vector<4x512xi1>, vector<4x512xf32>
    %c20 = arith.constant 20 : index
    %c0_19 = arith.constant 0 : index
    %52 = vector.load %arg5[%c20, %c0_19] : memref<36x512xf32, #tpu.memory_space<vmem>>, vector<4x512xf32>
    tpu.vector_store %arg5[%c20, %c0_19], %51 {strides = array<i32>} : memref<36x512xf32, #tpu.memory_space<vmem>>, vector<4x512xf32>,
    %c497_i32 = arith.constant 497 : i32
    %53 = tpu.dynamic_rotate %4 by %c497_i32 dim 1 : vector<4x512xf32>, i32 -> vector<4x512xf32>
    %54 = arith.andi %15, %17 : vector<1x512xi1>
    %cst_20 = arith.constant 0.000000e+00 : f32
    %55 = vector.shape_cast %54 : vector<1x512xi1> to vector<1x512xi1>
    %56 = vector.broadcast %55 : vector<1x512xi1> to vector<4x512xi1>
    %57 = vector.broadcast %cst_20 : f32 to vector<4x512xf32>
    %58 = arith.select %56, %53, %57 : vector<4x512xi1>, vector<4x512xf32>
    %c24 = arith.constant 24 : index
    %c0_21 = arith.constant 0 : index
    %59 = vector.load %arg5[%c24, %c0_21] : memref<36x512xf32, #tpu.memory_space<vmem>>, vector<4x512xf32>
    tpu.vector_store %arg5[%c24, %c0_21], %58 {strides = array<i32>} : memref<36x512xf32, #tpu.memory_space<vmem>>, vector<4x512xf32>,
    %c496_i32 = arith.constant 496 : i32
    %60 = tpu.dynamic_rotate %4 by %c496_i32 dim 1 : vector<4x512xf32>, i32 -> vector<4x512xf32>
    %cst_22 = arith.constant 0.000000e+00 : f32
    %61 = vector.shape_cast %15 : vector<1x512xi1> to vector<1x512xi1>
    %62 = vector.broadcast %61 : vector<1x512xi1> to vector<4x512xi1>
    %63 = vector.broadcast %cst_22 : f32 to vector<4x512xf32>
    %64 = arith.select %62, %60, %63 : vector<4x512xi1>, vector<4x512xf32>
    %c28 = arith.constant 28 : index
    %c0_23 = arith.constant 0 : index
    %65 = vector.load %arg5[%c28, %c0_23] : memref<36x512xf32, #tpu.memory_space<vmem>>, vector<4x512xf32>
    tpu.vector_store %arg5[%c28, %c0_23], %64 {strides = array<i32>} : memref<36x512xf32, #tpu.memory_space<vmem>>, vector<4x512xf32>,
    %c495_i32 = arith.constant 495 : i32
    %66 = tpu.dynamic_rotate %4 by %c495_i32 dim 1 : vector<4x512xf32>, i32 -> vector<4x512xf32>
    %67 = arith.andi %15, %19 : vector<1x512xi1>
    %cst_24 = arith.constant 0.000000e+00 : f32
    %68 = vector.shape_cast %67 : vector<1x512xi1> to vector<1x512xi1>
    %69 = vector.broadcast %68 : vector<1x512xi1> to vector<4x512xi1>
    %70 = vector.broadcast %cst_24 : f32 to vector<4x512xf32>
    %71 = arith.select %69, %66, %70 : vector<4x512xi1>, vector<4x512xf32>
    %c32 = arith.constant 32 : index
    %c0_25 = arith.constant 0 : index
    %72 = vector.load %arg5[%c32, %c0_25] : memref<36x512xf32, #tpu.memory_space<vmem>>, vector<4x512xf32>
    tpu.vector_store %arg5[%c32, %c0_25], %71 {strides = array<i32>} : memref<36x512xf32, #tpu.memory_space<vmem>>, vector<4x512xf32>,
    %c0_26 = arith.constant 0 : index
    %c0_27 = arith.constant 0 : index
    %73 = vector.load %arg2[%c0_26, %c0_27] : memref<8x36xf32, #tpu.memory_space<vmem>>, vector<8x36xf32>
    %c0_28 = arith.constant 0 : index
    %c0_29 = arith.constant 0 : index
    %74 = vector.load %arg5[%c0_28, %c0_29] : memref<36x512xf32, #tpu.memory_space<vmem>>, vector<36x512xf32>
    %cst_30 = arith.constant dense<0.000000e+00> : vector<8x512xf32>
    %75 = tpu.matmul %73, %74, %cst_30 {dimension_numbers = #tpu.dot_dimension_numbers<[1], [0], [0], [1], [0, 0, 1, 1], [], []>} : vector<8x36xf32>, vector<36x512xf32>, vector<8x512xf32> -> vector<8x512xf32>
    %c0_31 = arith.constant 0 : index
    %c0_32 = arith.constant 0 : index
    %76 = vector.load %arg3[%c0_31, %c0_32] : memref<8x1xf32, #tpu.memory_space<vmem>>, vector<8x1xf32>
    %77 = vector.broadcast %76 : vector<8x1xf32> to vector<8x512xf32>
    %78 = arith.addf %75, %77 : vector<8x512xf32>
    %cst_33 = arith.constant 0.000000e+00 : f32
    %79 = vector.broadcast %cst_33 : f32 to vector<8x512xf32>
    %80 = arith.cmpf oge, %78, %79 : vector<8x512xf32>
    %cst_34 = arith.constant 2.000000e-01 : f32
    %81 = vector.broadcast %cst_34 : f32 to vector<8x512xf32>
    %82 = arith.mulf %81, %78 : vector<8x512xf32>
    %83 = arith.select %80, %78, %82 : vector<8x512xi1>, vector<8x512xf32>
    %84 = vector.extract_strided_slice %83 {offsets = [0, 0], sizes = [8, 256], strides = [1, 1]} : vector<8x512xf32> to vector<8x256xf32>
    %c0_35 = arith.constant 0 : index
    %c0_36 = arith.constant 0 : index
    %c0_37 = arith.constant 0 : index
    %85 = vector.load %arg4[%c0_35, %c0_36, %c0_37] : memref<2x8x256xf32, #tpu.memory_space<vmem>>, vector<1x8x256xf32>
    %86 = vector.shape_cast %85 : vector<1x8x256xf32> to vector<8x256xf32>
    %87 = vector.shape_cast %84 : vector<8x256xf32> to vector<1x8x256xf32>
    tpu.vector_store %arg4[%c0_35, %c0_36, %c0_37], %87 {strides = array<i32>} : memref<2x8x256xf32, #tpu.memory_space<vmem>>, vector<1x8x256xf32>,
    %88 = vector.extract_strided_slice %83 {offsets = [0, 256], sizes = [8, 256], strides = [1, 1]} : vector<8x512xf32> to vector<8x256xf32>
    %c1_38 = arith.constant 1 : index
    %c0_39 = arith.constant 0 : index
    %c0_40 = arith.constant 0 : index
    %89 = vector.load %arg4[%c1_38, %c0_39, %c0_40] : memref<2x8x256xf32, #tpu.memory_space<vmem>>, vector<1x8x256xf32>
    %90 = vector.shape_cast %89 : vector<1x8x256xf32> to vector<8x256xf32>
    %91 = vector.shape_cast %88 : vector<8x256xf32> to vector<1x8x256xf32>
    tpu.vector_store %arg4[%c1_38, %c0_39, %c0_40], %91 {strides = array<i32>} : memref<2x8x256xf32, #tpu.memory_space<vmem>>, vector<1x8x256xf32>,
    return
  }
  func.func @transform_0(%arg0: i32) -> (i32, i32, i32) {
    %c0_i32 = arith.constant 0 : i32
    %c0_i32_0 = arith.constant 0 : i32
    %c0_i32_1 = arith.constant 0 : i32
    return %arg0, %c0_i32, %c0_i32_0 : i32, i32, i32
  }
  func.func @transform_1(%arg0: i32) -> (i32, i32) {
    %c0_i32 = arith.constant 0 : i32
    %c0_i32_0 = arith.constant 0 : i32
    %c0_i32_1 = arith.constant 0 : i32
    return %c0_i32, %c0_i32_0 : i32, i32
  }
  func.func @transform_2(%arg0: i32) -> (i32, i32) {
    %c0_i32 = arith.constant 0 : i32
    %c0_i32_0 = arith.constant 0 : i32
    %c0_i32_1 = arith.constant 0 : i32
    return %c0_i32, %c0_i32_0 : i32, i32
  }
  func.func @transform_3(%arg0: i32) -> (i32, i32, i32) {
    %c0_i32 = arith.constant 0 : i32
    %c0_i32_0 = arith.constant 0 : i32
    %c0_i32_1 = arith.constant 0 : i32
    return %arg0, %c0_i32, %c0_i32_0 : i32, i32, i32
  }
}

</mosaic_0001>

<llo_original>
// kernel: tpu_custom_call.1
$region0: #{tpu_custom_call.1}
  #allocation0 [shape = 'u32[]', space=smem, size = 0x4, offset = 0x4, fixed_abs, tag = 'smem constant byte address 0x4 - core index']
  #allocation1 [shape = 'u32[72,128]{1,0:T(1,128)}', space=vmem, size = 0x9000, scoped, tag = 'internal scratch']
  #allocation2 [shape = 'f32[36,512]{1,0:T(8,128)}', space=vmem, size = 0x14000, scoped, tag = 'scratch operand']
  %s0 = inlined_call_operand.hbm [shape: f32[2,4,256], index: 0, kind: input, shape index: {}]
  %s1 = inlined_call_operand.vmem [shape: f32[8,36], index: 1, kind: input, shape index: {}]
  %s2 = inlined_call_operand.vmem [shape: f32[8,1], index: 2, kind: input, shape index: {}]
  %s3 = inlined_call_operand.hbm [shape: f32[2,8,256], index: 3, kind: output, shape index: {}]
  %s4 = sld [smem:[#allocation0]]
  $region26: #{tpu_custom_call.1} parent=0
    _
  %s6 = ssub.s32 1, %s4
  %s7 = scalar_select 0, %s6, %s4
  $region1: #{tpu_custom_call.1} parent=0
    #allocation3 [shape = 'u8[8192]{0}', space=vmem, size = 0x2000, scoped, tag = 'input window, operand 0, single buffered']
    #allocation4 [shape = 's32[1]{0}', space=sflag, size = 0x4, scoped, tag = 'scoped memory for tpu_custom_call.1']
    #allocation5 [shape = 's32[1]{0}', space=sflag, size = 0x4, scoped, tag = 'scoped memory for tpu_custom_call.1']
    #allocation6 [shape = 'u8[16384]{0}', space=vmem, size = 0x4000, scoped, tag = 'output window, operand 0, single buffered']
    %8 = vsyncpa [#allocation4], 0
    %9 = vsyncpa [#allocation5], 0
    // Predicated region
    $region2: #{tpu_custom_call.1} parent=1 // pred_check
      _
    $region3: #{tpu_custom_call.1} parent=1 // pred_check_branch
      %11 = sbr.rel (0) target = $region5
    $region4: #{tpu_custom_call.1} parent=1 // pred_region
      %13 = vsyncadd [#allocation4], 0
      %s14 = sshll.u32 %s0, 4
      %s15 = int_to_ptr.hbm [resolvable:$true] %s14
      %s16 = sshll.u32 [#allocation3], 4
      %s17 = int_to_ptr.vmem [resolvable:$true] %s16
      %22 = dma.hbm_to_vmem [thread:$0]  %s15, 256, %s17, [#allocation4], 128, 128, 8
    $region5: #{tpu_custom_call.1} parent=1 // pred_fallthru
      _
    // Predicated region
    $region6: #{tpu_custom_call.1} parent=1 // pred_check
      _
    $region7: #{tpu_custom_call.1} parent=1 // pred_check_branch
      %24 = sbr.rel (0) target = $region9
    $region8: #{tpu_custom_call.1} parent=1 // pred_region
      _
    $region9: #{tpu_custom_call.1} parent=1 // pred_fallthru
      _
    // Predicated region
    $region10: #{tpu_custom_call.1} parent=1 // pred_check
      _
    $region11: #{tpu_custom_call.1} parent=1 // pred_check_branch
      %26 = sbr.rel (0) target = $region13
    $region12: #{tpu_custom_call.1} parent=1 // pred_region
      _
    $region13: #{tpu_custom_call.1} parent=1 // pred_fallthru
      _
    // Predicated region
    $region14: #{tpu_custom_call.1} parent=1 // pred_check
      _
    $region15: #{tpu_custom_call.1} parent=1 // pred_check_branch
      %28 = sbr.rel (0) target = $region17
    $region16: #{tpu_custom_call.1} parent=1 // pred_region
      %30 = dma.done [#allocation4], 256
    $region17: #{tpu_custom_call.1} parent=1 // pred_fallthru
      _
    %v31 = vld [vmem:[#allocation3] sm:$0xff]
    %s32 = scalar_lea.vmem [#allocation3], 8
    %v33 = vld [vmem:[%s32] sm:$0xff]
    %35 = vst [vmem:[#allocation1] ss:$2 sm:$0xff] %v31
    %v36 = vld.sshfl [vmem:[#allocation1] sm:$0xff pattern:$0x75316420]
    %v37 = vld.sshfl [vmem:[#allocation1 + $0x8] sm:$0xff pattern:$0x75316420]
    %41 = vst [vmem:[#allocation1] ss:$2 sm:$0xff] %v33
    %v42 = vld.sshfl [vmem:[#allocation1] sm:$0xff pattern:$0x75316420]
    %v43 = vld.sshfl [vmem:[#allocation1 + $0x8] sm:$0xff pattern:$0x75316420]
    %v46 = vlaneseq
    %v47 = vand.u32 %v46, 127
    %v48 = vadd.s32 %v47, 128
    %v49 = vadd.s32 %v47, 256
    %v50 = vadd.s32 %v47, 384
    %v51 = vshra.s32 %v47, 4
    %v52 = vshra.s32 %v48, 4
    %v53 = vshra.s32 %v49, 4
    %v54 = vshra.s32 %v50, 4
    %v55 = vand.u32 %v51, 15
    %v56 = vand.u32 %v52, 15
    %v57 = vand.u32 %v53, 15
    %v58 = vand.u32 %v54, 15
    %v59 = vand.u32 %v47, 15
    %v60 = vand.u32 %v48, 15
    %v61 = vand.u32 %v49, 15
    %v62 = vand.u32 %v50, 15
    %vm63 = vcmp.ge.s32.totalorder %v55, 1
    %vm64 = vcmp.ge.s32.totalorder %v56, 1
    %vm65 = vcmp.ge.s32.totalorder %v57, 1
    %vm66 = vcmp.ge.s32.totalorder %v58, 1
    %vm67 = vcmp.le.s32.totalorder %v55, 14
    %vm68 = vcmp.le.s32.totalorder %v56, 14
    %vm69 = vcmp.le.s32.totalorder %v57, 14
    %vm70 = vcmp.le.s32.totalorder %v58, 14
    %vm71 = vcmp.ge.s32.totalorder %v59, 1
    %vm72 = vcmp.ge.s32.totalorder %v60, 1
    %vm73 = vcmp.ge.s32.totalorder %v61, 1
    %vm74 = vcmp.ge.s32.totalorder %v62, 1
    %vm75 = vcmp.le.s32.totalorder %v59, 14
    %vm76 = vcmp.le.s32.totalorder %v60, 14
    %vm77 = vcmp.le.s32.totalorder %v61, 14
    %vm78 = vcmp.le.s32.totalorder %v62, 14
    %79 = vrot.lane.b32.xlu0 %v36, 17
    %v80 = vpop.permute.xlu0 %79
    %81 = vrot.lane.b32.xlu0 %v37, 17
    %v82 = vpop.permute.xlu0 %81
    %83 = vrot.lane.b32.xlu0 %v42, 17
    %v84 = vpop.permute.xlu0 %83
    %85 = vrot.lane.b32.xlu0 %v43, 17
    %v86 = vpop.permute.xlu0 %85
    %vm87 = vcmp.lt.s32.totalorder %v47, 17
    %v88 = vsel %vm87, %v84, %v86
    %v89 = vsel %vm87, %v82, %v84
    %v90 = vsel %vm87, %v80, %v82
    %v91 = vsel %vm87, %v86, %v80
    %vm92 = vmand %vm63, %vm71
    %vm93 = vmand %vm64, %vm72
    %vm94 = vmand %vm65, %vm73
    %vm95 = vmand %vm66, %vm74
    %v96 = vsel %vm92, 1, 0
    %v97 = vsel %vm93, 1, 0
    %v98 = vsel %vm94, 1, 0
    %v99 = vsel %vm95, 1, 0
    %vm100 = vcmp.eq.s32.totalorder %v96, 1
    %vm101 = vcmp.eq.s32.totalorder %v97, 1
    %vm102 = vcmp.eq.s32.totalorder %v98, 1
    %vm103 = vcmp.eq.s32.totalorder %v99, 1
    %v104 = vsel %vm100, %v91, 0.0
    %v105 = vsel %vm101, %v90, 0.0
    %v106 = vsel %vm102, %v89, 0.0
    %v107 = vsel %vm103, %v88, 0.0
    %108 = vst [vmem:[#allocation2] sm:$0xf] %v104
    %109 = vst [vmem:[#allocation2 + $0x8] sm:$0xf] %v105
    %110 = vst [vmem:[#allocation2 + $0x10] sm:$0xf] %v106
    %111 = vst [vmem:[#allocation2 + $0x18] sm:$0xf] %v107
    %112 = vrot.lane.b32.xlu0 %v36, 16
    %v113 = vpop.permute.xlu0 %112
    %114 = vrot.lane.b32.xlu0 %v37, 16
    %v115 = vpop.permute.xlu0 %114
    %116 = vrot.lane.b32.xlu0 %v42, 16
    %v117 = vpop.permute.xlu0 %116
    %118 = vrot.lane.b32.xlu0 %v43, 16
    %v119 = vpop.permute.xlu0 %118
    %vm120 = vcmp.lt.s32.totalorder %v47, 16
    %v121 = vsel %vm120, %v117, %v119
    %v122 = vsel %vm120, %v115, %v117
    %v123 = vsel %vm120, %v113, %v115
    %v124 = vsel %vm120, %v119, %v113
    %v125 = vsel %vm63, 1, 0
    %v126 = vsel %vm64, 1, 0
    %v127 = vsel %vm65, 1, 0
    %v128 = vsel %vm66, 1, 0
    %vm129 = vcmp.eq.s32.totalorder %v125, 1
    %vm130 = vcmp.eq.s32.totalorder %v126, 1
    %vm131 = vcmp.eq.s32.totalorder %v127, 1
    %vm132 = vcmp.eq.s32.totalorder %v128, 1
    %v133 = vsel %vm129, %v124, 0.0
    %v134 = vsel %vm130, %v123, 0.0
    %v135 = vsel %vm131, %v122, 0.0
    %v136 = vsel %vm132, %v121, 0.0
    %v141 = vrot.slane %v133, 4
    %v142 = vrot.slane %v134, 4
    %v143 = vrot.slane %v135, 4
    %v144 = vrot.slane %v136, 4
    %149 = vst [vmem:[#allocation2] sm:$0xf0] %v141
    %150 = vst [vmem:[#allocation2 + $0x8] sm:$0xf0] %v142
    %151 = vst [vmem:[#allocation2 + $0x10] sm:$0xf0] %v143
    %152 = vst [vmem:[#allocation2 + $0x18] sm:$0xf0] %v144
    %153 = vrot.lane.b32.xlu0 %v36, 15
    %v154 = vpop.permute.xlu0 %153
    %155 = vrot.lane.b32.xlu0 %v37, 15
    %v156 = vpop.permute.xlu0 %155
    %157 = vrot.lane.b32.xlu0 %v42, 15
    %v158 = vpop.permute.xlu0 %157
    %159 = vrot.lane.b32.xlu0 %v43, 15
    %v160 = vpop.permute.xlu0 %159
    %vm161 = vcmp.lt.s32.totalorder %v47, 15
    %v162 = vsel %vm161, %v158, %v160
    %v163 = vsel %vm161, %v156, %v158
    %v164 = vsel %vm161, %v154, %v156
    %v165 = vsel %vm161, %v160, %v154
    %vm166 = vmand %vm63, %vm75
    %vm167 = vmand %vm64, %vm76
    %vm168 = vmand %vm65, %vm77
    %vm169 = vmand %vm66, %vm78
    %v170 = vsel %vm166, 1, 0
    %v171 = vsel %vm167, 1, 0
    %v172 = vsel %vm168, 1, 0
    %v173 = vsel %vm169, 1, 0
    %vm174 = vcmp.eq.s32.totalorder %v170, 1
    %vm175 = vcmp.eq.s32.totalorder %v171, 1
    %vm176 = vcmp.eq.s32.totalorder %v172, 1
    %vm177 = vcmp.eq.s32.totalorder %v173, 1
    %v178 = vsel %vm174, %v165, 0.0
    %v179 = vsel %vm175, %v164, 0.0
    %v180 = vsel %vm176, %v163, 0.0
    %v181 = vsel %vm177, %v162, 0.0
    %182 = vst [vmem:[#allocation2 + $0x20] sm:$0xf] %v178
    %183 = vst [vmem:[#allocation2 + $0x28] sm:$0xf] %v179
    %184 = vst [vmem:[#allocation2 + $0x30] sm:$0xf] %v180
    %185 = vst [vmem:[#allocation2 + $0x38] sm:$0xf] %v181
    %186 = vrot.lane.b32.xlu0 %v36, 1
    %v187 = vpop.permute.xlu0 %186
    %188 = vrot.lane.b32.xlu0 %v37, 1
    %v189 = vpop.permute.xlu0 %188
    %190 = vrot.lane.b32.xlu0 %v42, 1
    %v191 = vpop.permute.xlu0 %190
    %192 = vrot.lane.b32.xlu0 %v43, 1
    %v193 = vpop.permute.xlu0 %192
    %vm194 = vcmp.lt.s32.totalorder %v47, 1
    %v195 = vsel %vm194, %v191, %v193
    %v196 = vsel %vm194, %v189, %v191
    %v197 = vsel %vm194, %v187, %v189
    %v198 = vsel %vm194, %v193, %v187
    %v199 = vsel %vm71, 1, 0
    %v200 = vsel %vm72, 1, 0
    %v201 = vsel %vm73, 1, 0
    %v202 = vsel %vm74, 1, 0
    %vm203 = vcmp.eq.s32.totalorder %v199, 1
    %vm204 = vcmp.eq.s32.totalorder %v200, 1
    %vm205 = vcmp.eq.s32.totalorder %v201, 1
    %vm206 = vcmp.eq.s32.totalorder %v202, 1
    %v207 = vsel %vm203, %v198, 0.0
    %v208 = vsel %vm204, %v197, 0.0
    %v209 = vsel %vm205, %v196, 0.0
    %v210 = vsel %vm206, %v195, 0.0
    %v215 = vrot.slane %v207, 4
    %v216 = vrot.slane %v208, 4
    %v217 = vrot.slane %v209, 4
    %v218 = vrot.slane %v210, 4
    %223 = vst [vmem:[#allocation2 + $0x20] sm:$0xf0] %v215
    %224 = vst [vmem:[#allocation2 + $0x28] sm:$0xf0] %v216
    %225 = vst [vmem:[#allocation2 + $0x30] sm:$0xf0] %v217
    %226 = vst [vmem:[#allocation2 + $0x38] sm:$0xf0] %v218
    %227 = vst [vmem:[#allocation2 + $0x40] sm:$0xf] %v36
    %228 = vst [vmem:[#allocation2 + $0x48] sm:$0xf] %v37
    %229 = vst [vmem:[#allocation2 + $0x50] sm:$0xf] %v42
    %230 = vst [vmem:[#allocation2 + $0x58] sm:$0xf] %v43
    %231 = vrot.lane.b32.xlu0 %v36, 127
    %v232 = vpop.permute.xlu0 %231
    %233 = vrot.lane.b32.xlu0 %v37, 127
    %v234 = vpop.permute.xlu0 %233
    %235 = vrot.lane.b32.xlu0 %v42, 127
    %v236 = vpop.permute.xlu0 %235
    %237 = vrot.lane.b32.xlu0 %v43, 127
    %v238 = vpop.permute.xlu0 %237
    %vm239 = vcmp.lt.s32.totalorder %v47, 127
    %v240 = vsel %vm239, %v236, %v238
    %v241 = vsel %vm239, %v234, %v236
    %v242 = vsel %vm239, %v232, %v234
    %v243 = vsel %vm239, %v238, %v232
    %v244 = vsel %vm75, 1, 0
    %v245 = vsel %vm76, 1, 0
    %v246 = vsel %vm77, 1, 0
    %v247 = vsel %vm78, 1, 0
    %vm248 = vcmp.eq.s32.totalorder %v244, 1
    %vm249 = vcmp.eq.s32.totalorder %v245, 1
    %vm250 = vcmp.eq.s32.totalorder %v246, 1
    %vm251 = vcmp.eq.s32.totalorder %v247, 1
    %v252 = vsel %vm248, %v242, 0.0
    %v253 = vsel %vm249, %v241, 0.0
    %v254 = vsel %vm250, %v240, 0.0
    %v255 = vsel %vm251, %v243, 0.0
    %v260 = vrot.slane %v252, 4
    %v261 = vrot.slane %v253, 4
    %v262 = vrot.slane %v254, 4
    %v263 = vrot.slane %v255, 4
    %268 = vst [vmem:[#allocation2 + $0x40] sm:$0xf0] %v260
    %269 = vst [vmem:[#allocation2 + $0x48] sm:$0xf0] %v261
    %270 = vst [vmem:[#allocation2 + $0x50] sm:$0xf0] %v262
    %271 = vst [vmem:[#allocation2 + $0x58] sm:$0xf0] %v263
    %272 = vrot.lane.b32.xlu0 %v36, 113
    %v273 = vpop.permute.xlu0 %272
    %274 = vrot.lane.b32.xlu0 %v37, 113
    %v275 = vpop.permute.xlu0 %274
    %276 = vrot.lane.b32.xlu0 %v42, 113
    %v277 = vpop.permute.xlu0 %276
    %278 = vrot.lane.b32.xlu0 %v43, 113
    %v279 = vpop.permute.xlu0 %278
    %vm280 = vcmp.lt.s32.totalorder %v47, 113
    %v281 = vsel %vm280, %v277, %v279
    %v282 = vsel %vm280, %v275, %v277
    %v283 = vsel %vm280, %v273, %v275
    %v284 = vsel %vm280, %v279, %v273
    %vm285 = vmand %vm67, %vm71
    %vm286 = vmand %vm68, %vm72
    %vm287 = vmand %vm69, %vm73
    %vm288 = vmand %vm70, %vm74
    %v289 = vsel %vm285, 1, 0
    %v290 = vsel %vm286, 1, 0
    %v291 = vsel %vm287, 1, 0
    %v292 = vsel %vm288, 1, 0
    %vm293 = vcmp.eq.s32.totalorder %v289, 1
    %vm294 = vcmp.eq.s32.totalorder %v290, 1
    %vm295 = vcmp.eq.s32.totalorder %v291, 1
    %vm296 = vcmp.eq.s32.totalorder %v292, 1
    %v297 = vsel %vm293, %v283, 0.0
    %v298 = vsel %vm294, %v282, 0.0
    %v299 = vsel %vm295, %v281, 0.0
    %v300 = vsel %vm296, %v284, 0.0
    %301 = vst [vmem:[#allocation2 + $0x60] sm:$0xf] %v297
    %302 = vst [vmem:[#allocation2 + $0x68] sm:$0xf] %v298
    %303 = vst [vmem:[#allocation2 + $0x70] sm:$0xf] %v299
    %304 = vst [vmem:[#allocation2 + $0x78] sm:$0xf] %v300
    %305 = vrot.lane.b32.xlu0 %v36, 112
    %v306 = vpop.permute.xlu0 %305
    %307 = vrot.lane.b32.xlu0 %v37, 112
    %v308 = vpop.permute.xlu0 %307
    %309 = vrot.lane.b32.xlu0 %v42, 112
    %v310 = vpop.permute.xlu0 %309
    %311 = vrot.lane.b32.xlu0 %v43, 112
    %v312 = vpop.permute.xlu0 %311
    %vm313 = vcmp.lt.s32.totalorder %v47, 112
    %v314 = vsel %vm313, %v310, %v312
    %v315 = vsel %vm313, %v308, %v310
    %v316 = vsel %vm313, %v306, %v308
    %v317 = vsel %vm313, %v312, %v306
    %v318 = vsel %vm67, 1, 0
    %v319 = vsel %vm68, 1, 0
    %v320 = vsel %vm69, 1, 0
    %v321 = vsel %vm70, 1, 0
    %vm322 = vcmp.eq.s32.totalorder %v318, 1
    %vm323 = vcmp.eq.s32.totalorder %v319, 1
    %vm324 = vcmp.eq.s32.totalorder %v320, 1
    %vm325 = vcmp.eq.s32.totalorder %v321, 1
    %v326 = vsel %vm322, %v316, 0.0
    %v327 = vsel %vm323, %v315, 0.0
    %v328 = vsel %vm324, %v314, 0.0
    %v329 = vsel %vm325, %v317, 0.0
    %v334 = vrot.slane %v326, 4
    %v335 = vrot.slane %v327, 4
    %v336 = vrot.slane %v328, 4
    %v337 = vrot.slane %v329, 4
    %342 = vst [vmem:[#allocation2 + $0x60] sm:$0xf0] %v334
    %343 = vst [vmem:[#allocation2 + $0x68] sm:$0xf0] %v335
    %344 = vst [vmem:[#allocation2 + $0x70] sm:$0xf0] %v336
    %345 = vst [vmem:[#allocation2 + $0x78] sm:$0xf0] %v337
    %346 = vrot.lane.b32.xlu0 %v36, 111
    %v347 = vpop.permute.xlu0 %346
    %348 = vrot.lane.b32.xlu0 %v37, 111
    %v349 = vpop.permute.xlu0 %348
    %350 = vrot.lane.b32.xlu0 %v42, 111
    %v351 = vpop.permute.xlu0 %350
    %352 = vrot.lane.b32.xlu0 %v43, 111
    %v353 = vpop.permute.xlu0 %352
    %vm354 = vcmp.lt.s32.totalorder %v47, 111
    %v355 = vsel %vm354, %v351, %v353
    %v356 = vsel %vm354, %v349, %v351
    %v357 = vsel %vm354, %v347, %v349
    %v358 = vsel %vm354, %v353, %v347
    %vm359 = vmand %vm67, %vm75
    %vm360 = vmand %vm68, %vm76
    %vm361 = vmand %vm69, %vm77
    %vm362 = vmand %vm70, %vm78
    %v363 = vsel %vm359, 1, 0
    %v364 = vsel %vm360, 1, 0
    %v365 = vsel %vm361, 1, 0
    %v366 = vsel %vm362, 1, 0
    %vm367 = vcmp.eq.s32.totalorder %v363, 1
    %vm368 = vcmp.eq.s32.totalorder %v364, 1
    %vm369 = vcmp.eq.s32.totalorder %v365, 1
    %vm370 = vcmp.eq.s32.totalorder %v366, 1
    %v371 = vsel %vm367, %v357, 0.0
    %v372 = vsel %vm368, %v356, 0.0
    %v373 = vsel %vm369, %v355, 0.0
    %v374 = vsel %vm370, %v358, 0.0
    %375 = vst [vmem:[#allocation2 + $0x80] sm:$0xf] %v371
    %376 = vst [vmem:[#allocation2 + $0x88] sm:$0xf] %v372
    %377 = vst [vmem:[#allocation2 + $0x90] sm:$0xf] %v373
    %378 = vst [vmem:[#allocation2 + $0x98] sm:$0xf] %v374
    %v379 = vld [vmem:[%s1] sm:$0xff]
    %v380 = vld [vmem:[#allocation2] sm:$0xff]
    %v381 = vld [vmem:[#allocation2 + $0x8] sm:$0xff]
    %v382 = vld [vmem:[#allocation2 + $0x10] sm:$0xff]
    %v383 = vld [vmem:[#allocation2 + $0x18] sm:$0xff]
    %v384 = vld [vmem:[#allocation2 + $0x20] sm:$0xff]
    %v385 = vld [vmem:[#allocation2 + $0x28] sm:$0xff]
    %v386 = vld [vmem:[#allocation2 + $0x30] sm:$0xff]
    %v387 = vld [vmem:[#allocation2 + $0x38] sm:$0xff]
    %v388 = vld [vmem:[#allocation2 + $0x40] sm:$0xff]
    %v389 = vld [vmem:[#allocation2 + $0x48] sm:$0xff]
    %v390 = vld [vmem:[#allocation2 + $0x50] sm:$0xff]
    %v391 = vld [vmem:[#allocation2 + $0x58] sm:$0xff]
    %v392 = vld [vmem:[#allocation2 + $0x60] sm:$0xff]
    %v393 = vld [vmem:[#allocation2 + $0x68] sm:$0xff]
    %v394 = vld [vmem:[#allocation2 + $0x70] sm:$0xff]
    %v395 = vld [vmem:[#allocation2 + $0x78] sm:$0xff]
    %v396 = vld [vmem:[#allocation2 + $0x80] sm:$0xf]
    %v397 = vld [vmem:[#allocation2 + $0x88] sm:$0xf]
    %v398 = vld [vmem:[#allocation2 + $0x90] sm:$0xf]
    %v399 = vld [vmem:[#allocation2 + $0x98] sm:$0xf]
    %v400 = vld [vmem:[%s2] sm:$0xff]
    %402 = vset.pattern.permute.xlu0 0
    %403 = vperm.xlu0 %402, %v400
    %v404 = vpop.permute.xlu0 %403
    %vm406 = vcmask 293888
    %v408 = vsel %vm406, %v379, 0
    %vm410 = vcmask 1043456
    %v412 = vsel %vm410, %v396, 0
    %v415 = vsel %vm410, %v397, 0
    %v418 = vsel %vm410, %v398, 0
    %v421 = vsel %vm410, %v399, 0
    %423 = vmatpush.msra.mxu0 0.0
    %424 = vmatpush.msra.mxu0 0.0
    %425 = vmatpush.msra.mxu0 0.0
    %426 = vmatpush.msra.mxu0 0.0
    %427 = vmatpush.msra.mxu0 0.0
    %428 = vmatpush.msra.mxu0 0.0
    %429 = vmatpush.msra.mxu0 0.0
    %430 = vmatpush.msra.mxu0 0.0
    %431 = vmatpush.msra.mxu0 0.0
    %432 = vmatpush.msra.mxu0 0.0
    %433 = vmatpush.msra.mxu0 0.0
    %434 = vmatpush.msra.mxu0 %v412
    %435 = vmatpush.msra.mxu0 %v392
    %436 = vmatpush.msra.mxu0 %v388
    %437 = vmatpush.msra.mxu0 %v384
    %438 = vmatpush.msra.mxu0 %v380
    %439 = vmatmul.f32.gmra.mxu0 %v408
    %v440 = vpop.f32.mrf.mxu0
    %v441 = vadd.f32 %v404, %v440
    %442 = vdwg.mxu0
    %443 = vmatpush.msra.mxu0 0.0
    %444 = vmatpush.msra.mxu0 0.0
    %445 = vmatpush.msra.mxu0 0.0
    %446 = vmatpush.msra.mxu0 0.0
    %447 = vmatpush.msra.mxu0 0.0
    %448 = vmatpush.msra.mxu0 0.0
    %449 = vmatpush.msra.mxu0 0.0
    %450 = vmatpush.msra.mxu0 0.0
    %451 = vmatpush.msra.mxu0 0.0
    %452 = vmatpush.msra.mxu0 0.0
    %453 = vmatpush.msra.mxu0 0.0
    %454 = vmatpush.msra.mxu0 %v415
    %455 = vmatpush.msra.mxu0 %v393
    %456 = vmatpush.msra.mxu0 %v389
    %457 = vmatpush.msra.mxu0 %v385
    %458 = vmatpush.msra.mxu0 %v381
    %459 = vmatmul.f32.gmra.mxu0 %v408
    %v460 = vpop.f32.mrf.mxu0
    %v461 = vadd.f32 %v404, %v460
    %462 = vdwg.mxu0
    %463 = vmatpush.msra.mxu0 0.0
    %464 = vmatpush.msra.mxu0 0.0
    %465 = vmatpush.msra.mxu0 0.0
    %466 = vmatpush.msra.mxu0 0.0
    %467 = vmatpush.msra.mxu0 0.0
    %468 = vmatpush.msra.mxu0 0.0
    %469 = vmatpush.msra.mxu0 0.0
    %470 = vmatpush.msra.mxu0 0.0
    %471 = vmatpush.msra.mxu0 0.0
    %472 = vmatpush.msra.mxu0 0.0
    %473 = vmatpush.msra.mxu0 0.0
    %474 = vmatpush.msra.mxu0 %v418
    %475 = vmatpush.msra.mxu0 %v394
    %476 = vmatpush.msra.mxu0 %v390
    %477 = vmatpush.msra.mxu0 %v386
    %478 = vmatpush.msra.mxu0 %v382
    %479 = vmatmul.f32.gmra.mxu0 %v408
    %v480 = vpop.f32.mrf.mxu0
    %v481 = vadd.f32 %v404, %v480
    %482 = vdwg.mxu0
    %483 = vmatpush.msra.mxu0 0.0
    %484 = vmatpush.msra.mxu0 0.0
    %485 = vmatpush.msra.mxu0 0.0
    %486 = vmatpush.msra.mxu0 0.0
    %487 = vmatpush.msra.mxu0 0.0
    %488 = vmatpush.msra.mxu0 0.0
    %489 = vmatpush.msra.mxu0 0.0
    %490 = vmatpush.msra.mxu0 0.0
    %491 = vmatpush.msra.mxu0 0.0
    %492 = vmatpush.msra.mxu0 0.0
    %493 = vmatpush.msra.mxu0 0.0
    %494 = vmatpush.msra.mxu0 %v421
    %495 = vmatpush.msra.mxu0 %v395
    %496 = vmatpush.msra.mxu0 %v391
    %497 = vmatpush.msra.mxu0 %v387
    %498 = vmatpush.msra.mxu0 %v383
    %499 = vmatmul.f32.gmra.mxu0 %v408
    %v500 = vpop.f32.mrf.mxu0
    %v501 = vadd.f32 %v404, %v500
    %502 = vdwg.mxu0
    %vm503 = vcmp.ge.f32.partialorder %v441, 0.0
    %vm504 = vcmp.ge.f32.partialorder %v461, 0.0
    %vm505 = vcmp.ge.f32.partialorder %v481, 0.0
    %vm506 = vcmp.ge.f32.partialorder %v501, 0.0
    %v507 = vmul.f32 %v441, 0.2
    %v508 = vmul.f32 %v461, 0.2
    %v509 = vmul.f32 %v481, 0.2
    %v510 = vmul.f32 %v501, 0.2
    %v511 = vsel %vm503, %v441, %v507
    %v512 = vsel %vm504, %v461, %v508
    %v513 = vsel %vm505, %v481, %v509
    %v514 = vsel %vm506, %v501, %v510
    %515 = vst [vmem:[#allocation6] sm:$0xff] %v511
    %516 = vst [vmem:[#allocation6 + $0x8] sm:$0xff] %v512
    %s517 = scalar_lea.vmem [#allocation6], 16
    %518 = vst [vmem:[%s517] sm:$0xff] %v513
    %519 = vst [vmem:[%s517 + $0x8] sm:$0xff] %v514
    // Predicated region
    $region18: #{tpu_custom_call.1} parent=1 // pred_check
      _
    $region19: #{tpu_custom_call.1} parent=1 // pred_check_branch
      %521 = sbr.rel (0) target = $region21
    $region20: #{tpu_custom_call.1} parent=1 // pred_region
      %523 = vsyncadd [#allocation5], 0
      %s524 = sshll.u32 [#allocation6], 4
      %s525 = int_to_ptr.vmem [resolvable:$true] %s524
      %s526 = sshll.u32 %s3, 4
      %s527 = int_to_ptr.hbm [resolvable:$true] %s526
      %532 = dma.vmem_to_hbm [thread:$0]  %s525, 512, %s527, [#allocation5], 256, 256, 16
    $region21: #{tpu_custom_call.1} parent=1 // pred_fallthru
      _
    // Predicated region
    $region22: #{tpu_custom_call.1} parent=1 // pred_check
      _
    $region23: #{tpu_custom_call.1} parent=1 // pred_check_branch
      %534 = sbr.rel (0) target = $region25
    $region24: #{tpu_custom_call.1} parent=1 // pred_region
      %536 = dma.done [#allocation5], 512
    $region25: #{tpu_custom_call.1} parent=1 // pred_fallthru
      _
    %537 = vsyncpa [#allocation4], 1
    %538 = vsyncpa [#allocation5], 1

</llo_original>
